<compile_context>
chip_gen: v6e
topology: v6e:2x2x1
jax: 0.10.0
libtpu: 0.0.40
codegen_flags: <defaults>
</compile_context>

<pallas_src>
import functools

import jax
import jax.numpy as jnp
from jax.experimental import pallas as pl
from jax.experimental.pallas import tpu as pltpu


# --------------------------------------------------------------------------
# Kernel
# --------------------------------------------------------------------------
def _gating_kernel(x_ref, w_ref, idx_ref, gate_ref, *, top_k, num_experts):
    x = x_ref[...]                      # (TB, D), native stream dtype
    w = w_ref[...]                      # (E, D),  native stream dtype

    # logits_t: (E, TB), f32 accumulate on the MXU.  Contract D with D so the
    # weight is used in its nn.Linear layout and the batch lands on lanes.
    logits = jax.lax.dot_general(
        w, x,
        dimension_numbers=(((1,), (1,)), ((), ())),
        preferred_element_type=jnp.float32)

    e, tb = logits.shape
    row_ids = jax.lax.broadcasted_iota(jnp.int32, (e, tb), 0)

    # Iterative top-k over the expert (sublane) axis; K is small and static.
    work = logits
    top_vals = []
    top_idxs = []
    for _ in range(top_k):
        m = jnp.max(work, axis=0, keepdims=True)                   # (1, TB)
        is_max = work == m
        idx = jnp.min(jnp.where(is_max, row_ids, num_experts),
                      axis=0, keepdims=True).astype(jnp.int32)     # (1, TB)
        top_vals.append(m)
        top_idxs.append(idx)
        work = jnp.where(row_ids == idx, -jnp.inf, work)

    # Softmax over the K selected logits.  top_vals[0] is already the row max,
    # so exp(v0 - max) == 1 and no extra max pass is needed.
    exps = [jnp.ones_like(top_vals[0])]
    for v in top_vals[1:]:
        exps.append(jnp.exp(v - top_vals[0]))
    denom = exps[0]
    for ev in exps[1:]:
        denom = denom + ev
    # Exact reciprocal: the ~12-bit approximate vrcp would exceed 1e-5 tol.
    inv = pl.reciprocal(denom, approx=False)

    # Direct per-k lane-dense row stores (no sublane concatenate / relayout).
    for k in range(top_k):
        idx_ref[pl.ds(k, 1), :] = top_idxs[k]
        gate_ref[pl.ds(k, 1), :] = (exps[k] * inv).astype(gate_ref.dtype)


# --------------------------------------------------------------------------
# Host-side sizing helpers (generation-aware, defensive against API drift)
# --------------------------------------------------------------------------
def _detect_num_tensorcores():
    try:
        info = pltpu.get_tpu_info()
        for name in ("num_tensorcores", "tensorcores_per_chip", "num_cores",
                     "core_count"):
            v = getattr(info, name, None)
            if isinstance(v, int) and v > 0:
                return v
    except Exception:
        pass
    return 1  # safe default: v5e/v6e have 1 TC per chip


def _detect_vmem_limit_bytes():
    try:
        info = pltpu.get_tpu_info()
        phys = getattr(info, "vmem_capacity_bytes", None)
        if phys:
            if phys <= 64 * 1024 * 1024:        # v7x: 64 MiB physical per TC
                return 48 * 1024 * 1024
            return 64 * 1024 * 1024             # v5e/v6e: 128 MiB physical
    except Exception:
        pass
    return 48 * 1024 * 1024                     # safe on every generation


def _choose_batch_tile(b, d, x_itemsize, out_itemsize, e, top_k,
                       vmem_limit_bytes, block_b, num_cores):
    """Pick the batch tile TB: as big as VMEM allows, multiple of 128 when
    tiling, >= ~4 MiB of x per step, whole multiple of num_cores grid steps."""
    # Per-row VMEM cost of one extra batch row.
    per_row = (2 * d * x_itemsize                 # x double-buffer
               + 8 * e * 4                        # f32 temps (logits/work/iota/...)
               + 2 * top_k * (4 + out_itemsize))  # output double-buffers
    weight_bytes = 2 * e * d * x_itemsize         # conservative (2 buffers)
    slack = 1 * 1024 * 1024
    budget = max(vmem_limit_bytes - weight_bytes - slack, per_row * 128)
    tb_max = budget // per_row

    # Target >= ~4 MiB of x per grid step to amortize per-step overhead.
    target_rows = pl.cdiv(4 * 1024 * 1024, max(1, d * x_itemsize))
    cap = block_b if block_b is not None else max(2048, target_rows)

    tb = int(min(b, cap, tb_max))
    if tb < b:
        tb = max(128, (tb // 128) * 128)

    # Guarantee the "parallel" batch grid has a whole multiple of
    # num_tensorcores steps so no core sits idle (v7x: 2 TCs/chip).
    if num_cores > 1 and b > 128:
        steps = pl.cdiv(b, tb)
        want = pl.cdiv(steps, num_cores) * num_cores
        if want != steps:
            tb2 = pl.cdiv(b, want)
            tb2 = max(128, (tb2 // 128) * 128)
            if tb2 < tb:
                tb = tb2
    return tb


# --------------------------------------------------------------------------
# Public wrapper
# --------------------------------------------------------------------------
def top_k_gating_forward(x, weight, top_k, *, block_b=None,
                         vmem_limit_bytes=None, num_cores=None,
                         stream_dtype=None):
    """x: [B, D]; weight: [E, D] (nn.Linear layout, no bias).

    Returns (top_k_indices [B, K] int32, top_k_gates [B, K] x.dtype).
    `stream_dtype=jnp.bfloat16` optionally halves HBM traffic (validate that
    near-tied logits don't flip the selected experts before enabling).
    """
    b, d = x.shape
    e, _ = weight.shape
    assert top_k <= e

    out_dtype = x.dtype                      # gates are returned type_as(x)
    if stream_dtype is not None:
        x_in = x.astype(stream_dtype)
        w_in = weight.astype(stream_dtype)
    else:
        x_in, w_in = x, weight

    x_itemsize = jnp.dtype(x_in.dtype).itemsize
    out_itemsize = jnp.dtype(out_dtype).itemsize

    if vmem_limit_bytes is None:
        vmem_limit_bytes = _detect_vmem_limit_bytes()
    if num_cores is None:
        num_cores = _detect_num_tensorcores()

    tb = _choose_batch_tile(b, d, x_itemsize, out_itemsize, e, top_k,
                            vmem_limit_bytes, block_b, num_cores)
    grid = (pl.cdiv(b, tb),)

    kernel = functools.partial(_gating_kernel, top_k=top_k, num_experts=e)

    cost = pl.CostEstimate(
        flops=2 * b * d * e,
        transcendentals=max(0, top_k - 1) * b,
        bytes_accessed=(b * d * x_itemsize + e * d * x_itemsize
                        + top_k * b * 4 + top_k * b * out_itemsize))

    def _weight_spec(single_buffer):
        if single_buffer:
            try:
                # Block index is constant -> the second pipeline buffer is
                # wasted VMEM; request a single buffer.
                return pl.BlockSpec((e, d), lambda i: (0, 0),
                                    pipeline_mode=pl.Buffered(1))
            except TypeError:
                pass
        return pl.BlockSpec((e, d), lambda i: (0, 0))

    def _run(single_buffer_weight):
        return pl.pallas_call(
            kernel,
            out_shape=(
                jax.ShapeDtypeStruct((top_k, b), jnp.int32),
                jax.ShapeDtypeStruct((top_k, b), out_dtype),
            ),
            grid=grid,
            in_specs=[
                pl.BlockSpec((tb, d), lambda i: (i, 0)),   # x: streamed
                _weight_spec(single_buffer_weight),        # weight: resident
            ],
            out_specs=(
                pl.BlockSpec((top_k, tb), lambda i: (0, i)),
                pl.BlockSpec((top_k, tb), lambda i: (0, i)),
            ),
            compiler_params=pltpu.CompilerParams(
                dimension_semantics=("parallel",),
                vmem_limit_bytes=vmem_limit_bytes),
            cost_estimate=cost,
        )(x_in, w_in)

    try:
        idx_t, gates_t = _run(True)
    except Exception:
        # Fallback if single-buffered (Buffered(1)) weight is rejected.
        idx_t, gates_t = _run(False)

    # Tiny layout fix-up outside the hot loop: (K, B) -> (B, K).
    return idx_t.T, gates_t.T


# --------------------------------------------------------------------------
# Reference + demo
# --------------------------------------------------------------------------
def _reference(x, weight, top_k):
    logits = (x @ weight.T).astype(jnp.float32)
    top_vals, top_idx = jax.lax.top_k(logits, top_k)
    gates = jax.nn.softmax(top_vals, axis=1).astype(x.dtype)
    return top_idx.astype(jnp.int32), gates


if __name__ == "__main__":
    # Small shapes consistent with the module: tokens=8, input_size=32,
    # experts=8, top_k=2.
    B, D, E, K = 8, 32, 8, 2

    key = jax.random.PRNGKey(0)
    kx, kw = jax.random.split(key)
    x = jax.random.normal(kx, (B, D), dtype=jnp.float32)
    # Deterministic "nn.Linear(input_size, num_experts, bias=False)" weight (E, D).
    weight = jax.random.normal(kw, (E, D), dtype=jnp.float32) * (1.0 / jnp.sqrt(D))

    idx, gates = top_k_gating_forward(x, weight, K)
    jax.block_until_ready((idx, gates))

    ref_idx, ref_gates = _reference(x, weight, K)

    assert idx.shape == (B, K) and gates.shape == (B, K)
    assert bool(jnp.all(idx == ref_idx)), "top-k indices mismatch"
    assert bool(jnp.allclose(gates, ref_gates, atol=1e-5, rtol=1e-5)), "gates mismatch"

    print("KERNEL_OK")
</pallas_src>

<mosaic_0001>
module attributes {stable_mosaic.version = 11 : i64} {
  func.func @_gating_kernel(%arg0: i32, %arg1: memref<8x32xf32, #tpu.memory_space<vmem>>, %arg2: memref<8x32xf32, #tpu.memory_space<vmem>>, %arg3: memref<2x8xi32, #tpu.memory_space<vmem>>, %arg4: memref<2x8xf32, #tpu.memory_space<vmem>>) attributes {dimension_semantics = [#tpu.dimension_semantics<parallel>], iteration_bounds = array<i64: 1>, scalar_prefetch = 0 : i64, scratch_operands = 0 : i64, tpu.core_type = #tpu.core_type<tc>, window_params = [{transform_indices = @transform_0, window_bounds = array<i64: 8, 32>}, {pipeline_mode = #tpu.pipeline_mode<synchronous>, transform_indices = @transform_1, window_bounds = array<i64: 8, 32>}, {transform_indices = @transform_2, window_bounds = array<i64: 2, 8>}, {transform_indices = @transform_3, window_bounds = array<i64: 2, 8>}]} {
    %c0 = arith.constant 0 : index
    %c0_0 = arith.constant 0 : index
    %0 = vector.load %arg1[%c0, %c0_0] : memref<8x32xf32, #tpu.memory_space<vmem>>, vector<8x32xf32>
    %c0_1 = arith.constant 0 : index
    %c0_2 = arith.constant 0 : index
    %1 = vector.load %arg2[%c0_1, %c0_2] : memref<8x32xf32, #tpu.memory_space<vmem>>, vector<8x32xf32>
    %cst = arith.constant dense<0.000000e+00> : vector<8x8xf32>
    %2 = tpu.matmul %1, %0, %cst {dimension_numbers = #tpu.dot_dimension_numbers<[1], [1], [0], [0], [0, 0, 1, 0], [], []>} : vector<8x32xf32>, vector<8x32xf32>, vector<8x8xf32> -> vector<8x8xf32>
    %3 = tpu.iota {dimensions = array<i32: 0>} : vector<8x8xi32>
    %cst_3 = arith.constant dense<0xFF800000> : vector<8xf32>
    %4 = vector.multi_reduction <maximumf>, %2, %cst_3 [0] : vector<8x8xf32> to vector<8xf32>
    %5 = vector.shape_cast %4 : vector<8xf32> to vector<1x8xf32>
    %6 = vector.broadcast %5 : vector<1x8xf32> to vector<8x8xf32>
    %7 = arith.cmpf oeq, %2, %6 : vector<8x8xf32>
    %c8_i32 = arith.constant 8 : i32
    %8 = vector.broadcast %c8_i32 : i32 to vector<8x8xi32>
    %9 = arith.select %7, %3, %8 : vector<8x8xi1>, vector<8x8xi32>
    %cst_4 = arith.constant dense<2147483647> : vector<8xi32>
    %10 = vector.multi_reduction <minsi>, %9, %cst_4 [0] : vector<8x8xi32> to vector<8xi32>
    %11 = vector.shape_cast %10 : vector<8xi32> to vector<1x8xi32>
    %12 = vector.broadcast %11 : vector<1x8xi32> to vector<8x8xi32>
    %13 = arith.cmpi eq, %3, %12 : vector<8x8xi32>
    %cst_5 = arith.constant 0xFF800000 : f32
    %14 = vector.broadcast %cst_5 : f32 to vector<8x8xf32>
    %15 = arith.select %13, %14, %2 : vector<8x8xi1>, vector<8x8xf32>
    %cst_6 = arith.constant dense<0xFF800000> : vector<8xf32>
    %16 = vector.multi_reduction <maximumf>, %15, %cst_6 [0] : vector<8x8xf32> to vector<8xf32>
    %17 = vector.shape_cast %16 : vector<8xf32> to vector<1x8xf32>
    %18 = vector.broadcast %17 : vector<1x8xf32> to vector<8x8xf32>
    %19 = arith.cmpf oeq, %15, %18 : vector<8x8xf32>
    %c8_i32_7 = arith.constant 8 : i32
    %20 = vector.broadcast %c8_i32_7 : i32 to vector<8x8xi32>
    %21 = arith.select %19, %3, %20 : vector<8x8xi1>, vector<8x8xi32>
    %cst_8 = arith.constant dense<2147483647> : vector<8xi32>
    %22 = vector.multi_reduction <minsi>, %21, %cst_8 [0] : vector<8x8xi32> to vector<8xi32>
    %23 = vector.shape_cast %22 : vector<8xi32> to vector<1x8xi32>
    %cst_9 = arith.constant 1.000000e+00 : f32
    %24 = vector.broadcast %cst_9 : f32 to vector<1x8xf32>
    %25 = arith.subf %17, %5 : vector<1x8xf32>
    %26 = math.exp %25 : vector<1x8xf32>
    %27 = arith.addf %24, %26 : vector<1x8xf32>
    %28 = tpu.reciprocal %27 : vector<1x8xf32> -> vector<1x8xf32>
    %c0_10 = arith.constant 0 : index
    %c0_11 = arith.constant 0 : index
    %29 = vector.load %arg3[%c0_10, %c0_11] : memref<2x8xi32, #tpu.memory_space<vmem>>, vector<1x8xi32>
    tpu.vector_store %arg3[%c0_10, %c0_11], %11 {strides = array<i32>} : memref<2x8xi32, #tpu.memory_space<vmem>>, vector<1x8xi32>,
    %30 = arith.mulf %24, %28 : vector<1x8xf32>
    %c0_12 = arith.constant 0 : index
    %c0_13 = arith.constant 0 : index
    %31 = vector.load %arg4[%c0_12, %c0_13] : memref<2x8xf32, #tpu.memory_space<vmem>>, vector<1x8xf32>
    tpu.vector_store %arg4[%c0_12, %c0_13], %30 {strides = array<i32>} : memref<2x8xf32, #tpu.memory_space<vmem>>, vector<1x8xf32>,
    %c1 = arith.constant 1 : index
    %c0_14 = arith.constant 0 : index
    %32 = vector.load %arg3[%c1, %c0_14] : memref<2x8xi32, #tpu.memory_space<vmem>>, vector<1x8xi32>
    tpu.vector_store %arg3[%c1, %c0_14], %23 {strides = array<i32>} : memref<2x8xi32, #tpu.memory_space<vmem>>, vector<1x8xi32>,
    %33 = arith.mulf %26, %28 : vector<1x8xf32>
    %c1_15 = arith.constant 1 : index
    %c0_16 = arith.constant 0 : index
    %34 = vector.load %arg4[%c1_15, %c0_16] : memref<2x8xf32, #tpu.memory_space<vmem>>, vector<1x8xf32>
    tpu.vector_store %arg4[%c1_15, %c0_16], %33 {strides = array<i32>} : memref<2x8xf32, #tpu.memory_space<vmem>>, vector<1x8xf32>,
    return
  }
  func.func @transform_0(%arg0: i32) -> (i32, i32) {
    %c0_i32 = arith.constant 0 : i32
    %c0_i32_0 = arith.constant 0 : i32
    return %arg0, %c0_i32 : i32, i32
  }
  func.func @transform_1(%arg0: i32) -> (i32, i32) {
    %c0_i32 = arith.constant 0 : i32
    %c0_i32_0 = arith.constant 0 : i32
    %c0_i32_1 = arith.constant 0 : i32
    return %c0_i32, %c0_i32_0 : i32, i32
  }
  func.func @transform_2(%arg0: i32) -> (i32, i32) {
    %c0_i32 = arith.constant 0 : i32
    %c0_i32_0 = arith.constant 0 : i32
    return %c0_i32, %arg0 : i32, i32
  }
  func.func @transform_3(%arg0: i32) -> (i32, i32) {
    %c0_i32 = arith.constant 0 : i32
    %c0_i32_0 = arith.constant 0 : i32
    return %c0_i32, %arg0 : i32, i32
  }
}

module attributes {stable_mosaic.version = 11 : i64} {
  func.func @_gating_kernel(%arg0: i32, %arg1: memref<8x32xf32, #tpu.memory_space<vmem>>, %arg2: memref<8x32xf32, #tpu.memory_space<vmem>>, %arg3: memref<2x8xi32, #tpu.memory_space<vmem>>, %arg4: memref<2x8xf32, #tpu.memory_space<vmem>>) attributes {dimension_semantics = [#tpu.dimension_semantics<parallel>], iteration_bounds = array<i64: 1>, scalar_prefetch = 0 : i64, scratch_operands = 0 : i64, tpu.core_type = #tpu.core_type<tc>, window_params = [{transform_indices = @transform_0, window_bounds = array<i64: 8, 32>}, {pipeline_mode = #tpu.pipeline_mode<synchronous>, transform_indices = @transform_1, window_bounds = array<i64: 8, 32>}, {transform_indices = @transform_2, window_bounds = array<i64: 2, 8>}, {transform_indices = @transform_3, window_bounds = array<i64: 2, 8>}]} {
    %c0 = arith.constant 0 : index
    %c0_0 = arith.constant 0 : index
    %0 = vector.load %arg1[%c0, %c0_0] : memref<8x32xf32, #tpu.memory_space<vmem>>, vector<8x32xf32>
    %c0_1 = arith.constant 0 : index
    %c0_2 = arith.constant 0 : index
    %1 = vector.load %arg2[%c0_1, %c0_2] : memref<8x32xf32, #tpu.memory_space<vmem>>, vector<8x32xf32>
    %cst = arith.constant dense<0.000000e+00> : vector<8x8xf32>
    %2 = tpu.matmul %1, %0, %cst {dimension_numbers = #tpu.dot_dimension_numbers<[1], [1], [0], [0], [0, 0, 1, 0], [], []>} : vector<8x32xf32>, vector<8x32xf32>, vector<8x8xf32> -> vector<8x8xf32>
    %3 = tpu.iota {dimensions = array<i32: 0>} : vector<8x8xi32>
    %cst_3 = arith.constant dense<0xFF800000> : vector<8xf32>
    %4 = vector.multi_reduction <maximumf>, %2, %cst_3 [0] : vector<8x8xf32> to vector<8xf32>
    %5 = vector.shape_cast %4 : vector<8xf32> to vector<1x8xf32>
    %6 = vector.broadcast %5 : vector<1x8xf32> to vector<8x8xf32>
    %7 = arith.cmpf oeq, %2, %6 : vector<8x8xf32>
    %c8_i32 = arith.constant 8 : i32
    %8 = vector.broadcast %c8_i32 : i32 to vector<8x8xi32>
    %9 = arith.select %7, %3, %8 : vector<8x8xi1>, vector<8x8xi32>
    %cst_4 = arith.constant dense<2147483647> : vector<8xi32>
    %10 = vector.multi_reduction <minsi>, %9, %cst_4 [0] : vector<8x8xi32> to vector<8xi32>
    %11 = vector.shape_cast %10 : vector<8xi32> to vector<1x8xi32>
    %12 = vector.broadcast %11 : vector<1x8xi32> to vector<8x8xi32>
    %13 = arith.cmpi eq, %3, %12 : vector<8x8xi32>
    %cst_5 = arith.constant 0xFF800000 : f32
    %14 = vector.broadcast %cst_5 : f32 to vector<8x8xf32>
    %15 = arith.select %13, %14, %2 : vector<8x8xi1>, vector<8x8xf32>
    %cst_6 = arith.constant dense<0xFF800000> : vector<8xf32>
    %16 = vector.multi_reduction <maximumf>, %15, %cst_6 [0] : vector<8x8xf32> to vector<8xf32>
    %17 = vector.shape_cast %16 : vector<8xf32> to vector<1x8xf32>
    %18 = vector.broadcast %17 : vector<1x8xf32> to vector<8x8xf32>
    %19 = arith.cmpf oeq, %15, %18 : vector<8x8xf32>
    %c8_i32_7 = arith.constant 8 : i32
    %20 = vector.broadcast %c8_i32_7 : i32 to vector<8x8xi32>
    %21 = arith.select %19, %3, %20 : vector<8x8xi1>, vector<8x8xi32>
    %cst_8 = arith.constant dense<2147483647> : vector<8xi32>
    %22 = vector.multi_reduction <minsi>, %21, %cst_8 [0] : vector<8x8xi32> to vector<8xi32>
    %23 = vector.shape_cast %22 : vector<8xi32> to vector<1x8xi32>
    %cst_9 = arith.constant 1.000000e+00 : f32
    %24 = vector.broadcast %cst_9 : f32 to vector<1x8xf32>
    %25 = arith.subf %17, %5 : vector<1x8xf32>
    %26 = math.exp %25 : vector<1x8xf32>
    %27 = arith.addf %24, %26 : vector<1x8xf32>
    %28 = tpu.reciprocal %27 : vector<1x8xf32> -> vector<1x8xf32>
    %c0_10 = arith.constant 0 : index
    %c0_11 = arith.constant 0 : index
    %29 = vector.load %arg3[%c0_10, %c0_11] : memref<2x8xi32, #tpu.memory_space<vmem>>, vector<1x8xi32>
    tpu.vector_store %arg3[%c0_10, %c0_11], %11 {strides = array<i32>} : memref<2x8xi32, #tpu.memory_space<vmem>>, vector<1x8xi32>,
    %30 = arith.mulf %24, %28 : vector<1x8xf32>
    %c0_12 = arith.constant 0 : index
    %c0_13 = arith.constant 0 : index
    %31 = vector.load %arg4[%c0_12, %c0_13] : memref<2x8xf32, #tpu.memory_space<vmem>>, vector<1x8xf32>
    tpu.vector_store %arg4[%c0_12, %c0_13], %30 {strides = array<i32>} : memref<2x8xf32, #tpu.memory_space<vmem>>, vector<1x8xf32>,
    %c1 = arith.constant 1 : index
    %c0_14 = arith.constant 0 : index
    %32 = vector.load %arg3[%c1, %c0_14] : memref<2x8xi32, #tpu.memory_space<vmem>>, vector<1x8xi32>
    tpu.vector_store %arg3[%c1, %c0_14], %23 {strides = array<i32>} : memref<2x8xi32, #tpu.memory_space<vmem>>, vector<1x8xi32>,
    %33 = arith.mulf %26, %28 : vector<1x8xf32>
    %c1_15 = arith.constant 1 : index
    %c0_16 = arith.constant 0 : index
    %34 = vector.load %arg4[%c1_15, %c0_16] : memref<2x8xf32, #tpu.memory_space<vmem>>, vector<1x8xf32>
    tpu.vector_store %arg4[%c1_15, %c0_16], %33 {strides = array<i32>} : memref<2x8xf32, #tpu.memory_space<vmem>>, vector<1x8xf32>,
    return
  }
  func.func @transform_0(%arg0: i32) -> (i32, i32) {
    %c0_i32 = arith.constant 0 : i32
    %c0_i32_0 = arith.constant 0 : i32
    return %arg0, %c0_i32 : i32, i32
  }
  func.func @transform_1(%arg0: i32) -> (i32, i32) {
    %c0_i32 = arith.constant 0 : i32
    %c0_i32_0 = arith.constant 0 : i32
    %c0_i32_1 = arith.constant 0 : i32
    return %c0_i32, %c0_i32_0 : i32, i32
  }
  func.func @transform_2(%arg0: i32) -> (i32, i32) {
    %c0_i32 = arith.constant 0 : i32
    %c0_i32_0 = arith.constant 0 : i32
    return %c0_i32, %arg0 : i32, i32
  }
  func.func @transform_3(%arg0: i32) -> (i32, i32) {
    %c0_i32 = arith.constant 0 : i32
    %c0_i32_0 = arith.constant 0 : i32
    return %c0_i32, %arg0 : i32, i32
  }
}

</mosaic_0001>

<llo_original>
// kernel: tpu_custom_call.1
$region0: #{tpu_custom_call.1}
  #allocation0 [shape = 'u32[]', space=smem, size = 0x4, offset = 0x4, fixed_abs, tag = 'smem constant byte address 0x4 - core index']
  #allocation1 [shape = 'u32[144,128]{1,0:T(1,128)}', space=vmem, size = 0x12000, scoped, tag = 'internal scratch']
  %s0 = inlined_call_operand.hbm [shape: f32[8,32], index: 0, kind: input, shape index: {}]
  %s1 = inlined_call_operand.hbm [shape: f32[8,32], index: 1, kind: input, shape index: {}]
  %s2 = inlined_call_operand.hbm [shape: s32[2,8], index: 2, kind: output, shape index: {0}]
  %s3 = inlined_call_operand.hbm [shape: f32[2,8], index: 3, kind: output, shape index: {1}]
  %4 = xla_tuple %s2, %s3
  %s5 = sld [smem:[#allocation0]]
  $region34: #{tpu_custom_call.1} parent=0
    _
  %s7 = ssub.s32 1, %s5
  %s8 = scalar_select 0, %s7, %s5
  $region1: #{tpu_custom_call.1} parent=0
    #allocation2 [shape = 'u8[4096]{0}', space=vmem, size = 0x1000, scoped, tag = 'input window, operand 0, single buffered']
    #allocation3 [shape = 's32[1]{0}', space=sflag, size = 0x4, scoped, tag = 'scoped memory for tpu_custom_call.1']
    #allocation4 [shape = 's32[1]{0}', space=sflag, size = 0x4, scoped, tag = 'scoped memory for tpu_custom_call.1']
    #allocation5 [shape = 'u8[4096]{0}', space=vmem, size = 0x1000, scoped, tag = 'input window, operand 1, single buffered']
    #allocation6 [shape = 's32[1]{0}', space=sflag, size = 0x4, scoped, tag = 'scoped memory for tpu_custom_call.1']
    #allocation7 [shape = 'u8[1024]{0}', space=vmem, size = 0x400, scoped, tag = 'output window, operand 0, single buffered']
    #allocation8 [shape = 'u8[1024]{0}', space=vmem, size = 0x400, scoped, tag = 'output window, operand 1, single buffered']
    #allocation9 [shape = 's32[1]{0}', space=sflag, size = 0x4, scoped, tag = 'scoped memory for tpu_custom_call.1']
    %9 = vsyncpa [#allocation3], 0
    %10 = vsyncpa [#allocation6], 0
    %11 = vsyncpa [#allocation4], 0
    %12 = vsyncpa [#allocation9], 0
    // Predicated region
    $region2: #{tpu_custom_call.1} parent=1 // pred_check
      _
    $region3: #{tpu_custom_call.1} parent=1 // pred_check_branch
      %14 = sbr.rel (0) target = $region5
    $region4: #{tpu_custom_call.1} parent=1 // pred_region
      %s16 = ssub.s32 128, 128
      %17 = vsyncadd [#allocation3], %s16
      %s19 = sshll.u32 [#allocation2], 4
      %s20 = int_to_ptr.vmem [resolvable:$true] %s19
      %22 = dma.hbm_to_vmem [thread:$0]  %s0, 128, %s20, [#allocation3]
    $region5: #{tpu_custom_call.1} parent=1 // pred_fallthru
      _
    // Predicated region
    $region6: #{tpu_custom_call.1} parent=1 // pred_check
      _
    $region7: #{tpu_custom_call.1} parent=1 // pred_check_branch
      %24 = sbr.rel (0) target = $region9
    $region8: #{tpu_custom_call.1} parent=1 // pred_region
      %s26 = ssub.s32 128, 128
      %27 = vsyncadd [#allocation6], %s26
      %s29 = sshll.u32 [#allocation5], 4
      %s30 = int_to_ptr.vmem [resolvable:$true] %s29
      %32 = dma.hbm_to_vmem [thread:$0]  %s1, 128, %s30, [#allocation6]
    $region9: #{tpu_custom_call.1} parent=1 // pred_fallthru
      _
    // Predicated region
    $region10: #{tpu_custom_call.1} parent=1 // pred_check
      _
    $region11: #{tpu_custom_call.1} parent=1 // pred_check_branch
      %34 = sbr.rel (0) target = $region13
    $region12: #{tpu_custom_call.1} parent=1 // pred_region
      %35 = dma.done [#allocation3], 128
    $region13: #{tpu_custom_call.1} parent=1 // pred_fallthru
      _
    // Predicated region
    $region14: #{tpu_custom_call.1} parent=1 // pred_check
      _
    $region15: #{tpu_custom_call.1} parent=1 // pred_check_branch
      %37 = sbr.rel (0) target = $region17
    $region16: #{tpu_custom_call.1} parent=1 // pred_region
      %38 = dma.done [#allocation6], 128
    $region17: #{tpu_custom_call.1} parent=1 // pred_fallthru
      _
    %v39 = vld [vmem:[#allocation2] sm:$0xff]
    %v40 = vld [vmem:[#allocation5] sm:$0xff]
    %vm41 = vcmask 261120
    %v43 = vsel %vm41, %v40, 0
    %v46 = vsel %vm41, %v39, 0
    %48 = vmatprep.subr.mxu0 0.0
    %49 = vmatpush1.xpose.msra.mxu0 0.0
    %50 = vmatprep.subr.mxu0 0.0
    %51 = vmatpush1.xpose.msra.mxu0 0.0
    %52 = vmatprep.subr.mxu0 0.0
    %53 = vmatpush1.xpose.msra.mxu0 0.0
    %54 = vmatprep.subr.mxu0 0.0
    %55 = vmatpush1.xpose.msra.mxu0 0.0
    %56 = vmatprep.subr.mxu0 0.0
    %57 = vmatpush1.xpose.msra.mxu0 0.0
    %58 = vmatprep.subr.mxu0 0.0
    %59 = vmatpush1.xpose.msra.mxu0 0.0
    %60 = vmatprep.subr.mxu0 0.0
    %61 = vmatpush1.xpose.msra.mxu0 0.0
    %62 = vmatprep.subr.mxu0 0.0
    %63 = vmatpush1.xpose.msra.mxu0 0.0
    %64 = vmatprep.subr.mxu0 0.0
    %65 = vmatpush1.xpose.msra.mxu0 0.0
    %66 = vmatprep.subr.mxu0 0.0
    %67 = vmatpush1.xpose.msra.mxu0 0.0
    %68 = vmatprep.subr.mxu0 0.0
    %69 = vmatpush1.xpose.msra.mxu0 0.0
    %70 = vmatprep.subr.mxu0 0.0
    %71 = vmatpush1.xpose.msra.mxu0 0.0
    %72 = vmatprep.subr.mxu0 0.0
    %73 = vmatpush1.xpose.msra.mxu0 0.0
    %74 = vmatprep.subr.mxu0 0.0
    %75 = vmatpush1.xpose.msra.mxu0 0.0
    %76 = vmatprep.subr.mxu0 0.0
    %77 = vmatpush1.xpose.msra.mxu0 0.0
    %78 = vmatprep.subr.mxu0 0.0
    %79 = vmatpush1.xpose.msra.mxu0 %v46
    %80 = vmatprep.subr.mxu0 0.0
    %81 = vmatpush2.xpose.msra.mxu0 0.0
    %82 = vmatprep.subr.mxu0 0.0
    %83 = vmatpush2.xpose.msra.mxu0 0.0
    %84 = vmatprep.subr.mxu0 0.0
    %85 = vmatpush2.xpose.msra.mxu0 0.0
    %86 = vmatprep.subr.mxu0 0.0
    %87 = vmatpush2.xpose.msra.mxu0 0.0
    %88 = vmatprep.subr.mxu0 0.0
    %89 = vmatpush2.xpose.msra.mxu0 0.0
    %90 = vmatprep.subr.mxu0 0.0
    %91 = vmatpush2.xpose.msra.mxu0 0.0
    %92 = vmatprep.subr.mxu0 0.0
    %93 = vmatpush2.xpose.msra.mxu0 0.0
    %94 = vmatprep.subr.mxu0 0.0
    %95 = vmatpush2.xpose.msra.mxu0 0.0
    %96 = vmatprep.subr.mxu0 0.0
    %97 = vmatpush2.xpose.msra.mxu0 0.0
    %98 = vmatprep.subr.mxu0 0.0
    %99 = vmatpush2.xpose.msra.mxu0 0.0
    %100 = vmatprep.subr.mxu0 0.0
    %101 = vmatpush2.xpose.msra.mxu0 0.0
    %102 = vmatprep.subr.mxu0 0.0
    %103 = vmatpush2.xpose.msra.mxu0 0.0
    %104 = vmatprep.subr.mxu0 0.0
    %105 = vmatpush2.xpose.msra.mxu0 0.0
    %106 = vmatprep.subr.mxu0 0.0
    %107 = vmatpush2.xpose.msra.mxu0 0.0
    %108 = vmatprep.subr.mxu0 0.0
    %109 = vmatpush2.xpose.msra.mxu0 0.0
    %110 = vmatprep.subr.mxu0 0.0
    %111 = vmatpush2.xpose.msra.mxu0 0.0
    %112 = vmatprep.mubr.f32.mxu0 0.0
    %113 = vmatmul.mubr.f32.gmra.mxu0 %v43
    %v114 = vpop.f32.mrf.mxu0
    %v115 = vadd.f32 0.0, %v114
    %v116 = vpop.f32.mrf.mxu0
    %117 = vdwg.mxu0
    %v118 = vlaneseq
    %v119 = vshrl.u32 %v118, 7
    %vm120 = vcmask 64512
    %v121 = vsel %vm120, %v115, -inf
    %v122 = vrot.slane %v121, 4
    %v123 = vmax.f32 %v121, %v122
    %v124 = vrot.slane %v123, 2
    %v125 = vmax.f32 %v123, %v124
    %v126 = vrot.slane %v125, 1
    %v127 = vmax.f32 %v125, %v126
    %vm128 = vcmp.eq.f32.partialorder %v115, %v127
    %v129 = vsel %vm128, %v119, 8
    %v130 = vsel %vm120, %v129, 2147483647
    %v131 = vrot.slane %v130, 4
    %vm132 = vcmp.lt.s32.totalorder %v130, %v131
    %v133 = vsel %vm132, %v130, %v131
    %v134 = vrot.slane %v133, 2
    %vm135 = vcmp.lt.s32.totalorder %v133, %v134
    %v136 = vsel %vm135, %v133, %v134
    %v137 = vrot.slane %v136, 1
    %vm138 = vcmp.lt.s32.totalorder %v136, %v137
    %v139 = vsel %vm138, %v136, %v137
    %vm140 = vcmp.eq.s32.totalorder %v119, %v139
    %v141 = vsel %vm140, -inf, %v115
    %v142 = vsel %vm120, %v141, -inf
    %v143 = vrot.slane %v142, 4
    %v144 = vmax.f32 %v142, %v143
    %v145 = vrot.slane %v144, 2
    %v146 = vmax.f32 %v144, %v145
    %v147 = vrot.slane %v146, 1
    %v148 = vmax.f32 %v146, %v147
    %vm149 = vcmp.eq.f32.partialorder %v141, %v148
    %v150 = vsel %vm149, %v119, 8
    %v151 = vsel %vm120, %v150, 2147483647
    %v152 = vrot.slane %v151, 4
    %vm153 = vcmp.lt.s32.totalorder %v151, %v152
    %v154 = vsel %vm153, %v151, %v152
    %v155 = vrot.slane %v154, 2
    %vm156 = vcmp.lt.s32.totalorder %v154, %v155
    %v157 = vsel %vm156, %v154, %v155
    %v158 = vrot.slane %v157, 1
    %vm159 = vcmp.lt.s32.totalorder %v157, %v158
    %v160 = vsel %vm159, %v157, %v158
    %v161 = vsub.f32 %v148, %v127
    %v162 = vmul.f32 %v161, 1.442695
    %v163 = vpow.pop %v162
    %v164 = vadd.f32 %v163, 1.0
    %v165 = vrcp.pop %v164
    %vm166 = vcmask 57344
    %167 = vst.msk [vmem:[#allocation7] sm:$0x1] %vm166, %v139
    %168 = vst.msk [vmem:[#allocation8] sm:$0x1] %vm166, %v165
    %169 = vst.msk [vmem:[#allocation7 + $0x1] sm:$0x1] %vm166, %v160
    %v170 = vmul.f32 %v163, %v165
    %171 = vst.msk [vmem:[#allocation8 + $0x1] sm:$0x1] %vm166, %v170
    // Predicated region
    $region18: #{tpu_custom_call.1} parent=1 // pred_check
      _
    $region19: #{tpu_custom_call.1} parent=1 // pred_check_branch
      %173 = sbr.rel (0) target = $region21
    $region20: #{tpu_custom_call.1} parent=1 // pred_region
      %s175 = ssub.s32 32, 32
      %176 = vsyncadd [#allocation4], %s175
      %s178 = sshll.u32 [#allocation7], 4
      %s179 = int_to_ptr.vmem [resolvable:$true] %s178
      %181 = dma.vmem_to_hbm [thread:$0]  %s179, 32, %s2, [#allocation4]
    $region21: #{tpu_custom_call.1} parent=1 // pred_fallthru
      _
    // Predicated region
    $region22: #{tpu_custom_call.1} parent=1 // pred_check
      _
    $region23: #{tpu_custom_call.1} parent=1 // pred_check_branch
      %183 = sbr.rel (0) target = $region25
    $region24: #{tpu_custom_call.1} parent=1 // pred_region
      %s185 = ssub.s32 32, 32
      %186 = vsyncadd [#allocation9], %s185
      %s188 = sshll.u32 [#allocation8], 4
      %s189 = int_to_ptr.vmem [resolvable:$true] %s188
      %191 = dma.vmem_to_hbm [thread:$0]  %s189, 32, %s3, [#allocation9]
    $region25: #{tpu_custom_call.1} parent=1 // pred_fallthru
      _
    // Predicated region
    $region26: #{tpu_custom_call.1} parent=1 // pred_check
      _
    $region27: #{tpu_custom_call.1} parent=1 // pred_check_branch
      %193 = sbr.rel (0) target = $region29
    $region28: #{tpu_custom_call.1} parent=1 // pred_region
      %194 = dma.done [#allocation4], 32
    $region29: #{tpu_custom_call.1} parent=1 // pred_fallthru
      _
    // Predicated region
    $region30: #{tpu_custom_call.1} parent=1 // pred_check
      _
    $region31: #{tpu_custom_call.1} parent=1 // pred_check_branch
      %196 = sbr.rel (0) target = $region33
    $region32: #{tpu_custom_call.1} parent=1 // pred_region
      %197 = dma.done [#allocation9], 32
    $region33: #{tpu_custom_call.1} parent=1 // pred_fallthru
      _
    %198 = vsyncpa [#allocation3], 1
    %199 = vsyncpa [#allocation6], 1
    %200 = vsyncpa [#allocation4], 1
    %201 = vsyncpa [#allocation9], 1

// kernel: tpu_custom_call.1
$region0: #{tpu_custom_call.1}
  #allocation0 [shape = 'u32[]', space=smem, size = 0x4, offset = 0x4, fixed_abs, tag = 'smem constant byte address 0x4 - core index']
  #allocation1 [shape = 'u32[144,128]{1,0:T(1,128)}', space=vmem, size = 0x12000, scoped, tag = 'internal scratch']
  %s0 = inlined_call_operand.hbm [shape: f32[8,32], index: 0, kind: input, shape index: {}]
  %s1 = inlined_call_operand.hbm [shape: f32[8,32], index: 1, kind: input, shape index: {}]
  %s2 = inlined_call_operand.hbm [shape: s32[2,8], index: 2, kind: output, shape index: {0}]
  %s3 = inlined_call_operand.hbm [shape: f32[2,8], index: 3, kind: output, shape index: {1}]
  %4 = xla_tuple %s2, %s3
  %s5 = sld [smem:[#allocation0]]
  $region34: #{tpu_custom_call.1} parent=0
    _
  %s7 = ssub.s32 1, %s5
  %s8 = scalar_select 0, %s7, %s5
  $region1: #{tpu_custom_call.1} parent=0
    #allocation2 [shape = 'u8[4096]{0}', space=vmem, size = 0x1000, scoped, tag = 'input window, operand 0, single buffered']
    #allocation3 [shape = 's32[1]{0}', space=sflag, size = 0x4, scoped, tag = 'scoped memory for tpu_custom_call.1']
    #allocation4 [shape = 's32[1]{0}', space=sflag, size = 0x4, scoped, tag = 'scoped memory for tpu_custom_call.1']
    #allocation5 [shape = 'u8[4096]{0}', space=vmem, size = 0x1000, scoped, tag = 'input window, operand 1, single buffered']
    #allocation6 [shape = 's32[1]{0}', space=sflag, size = 0x4, scoped, tag = 'scoped memory for tpu_custom_call.1']
    #allocation7 [shape = 'u8[1024]{0}', space=vmem, size = 0x400, scoped, tag = 'output window, operand 0, single buffered']
    #allocation8 [shape = 'u8[1024]{0}', space=vmem, size = 0x400, scoped, tag = 'output window, operand 1, single buffered']
    #allocation9 [shape = 's32[1]{0}', space=sflag, size = 0x4, scoped, tag = 'scoped memory for tpu_custom_call.1']
    %9 = vsyncpa [#allocation3], 0
    %10 = vsyncpa [#allocation6], 0
    %11 = vsyncpa [#allocation4], 0
    %12 = vsyncpa [#allocation9], 0
    // Predicated region
    $region2: #{tpu_custom_call.1} parent=1 // pred_check
      _
    $region3: #{tpu_custom_call.1} parent=1 // pred_check_branch
      %14 = sbr.rel (0) target = $region5
    $region4: #{tpu_custom_call.1} parent=1 // pred_region
      %s16 = ssub.s32 128, 128
      %17 = vsyncadd [#allocation3], %s16
      %s19 = sshll.u32 [#allocation2], 4
      %s20 = int_to_ptr.vmem [resolvable:$true] %s19
      %22 = dma.hbm_to_vmem [thread:$0]  %s0, 128, %s20, [#allocation3]
    $region5: #{tpu_custom_call.1} parent=1 // pred_fallthru
      _
    // Predicated region
    $region6: #{tpu_custom_call.1} parent=1 // pred_check
      _
    $region7: #{tpu_custom_call.1} parent=1 // pred_check_branch
      %24 = sbr.rel (0) target = $region9
    $region8: #{tpu_custom_call.1} parent=1 // pred_region
      %s26 = ssub.s32 128, 128
      %27 = vsyncadd [#allocation6], %s26
      %s29 = sshll.u32 [#allocation5], 4
      %s30 = int_to_ptr.vmem [resolvable:$true] %s29
      %32 = dma.hbm_to_vmem [thread:$0]  %s1, 128, %s30, [#allocation6]
    $region9: #{tpu_custom_call.1} parent=1 // pred_fallthru
      _
    // Predicated region
    $region10: #{tpu_custom_call.1} parent=1 // pred_check
      _
    $region11: #{tpu_custom_call.1} parent=1 // pred_check_branch
      %34 = sbr.rel (0) target = $region13
    $region12: #{tpu_custom_call.1} parent=1 // pred_region
      %35 = dma.done [#allocation3], 128
    $region13: #{tpu_custom_call.1} parent=1 // pred_fallthru
      _
    // Predicated region
    $region14: #{tpu_custom_call.1} parent=1 // pred_check
      _
    $region15: #{tpu_custom_call.1} parent=1 // pred_check_branch
      %37 = sbr.rel (0) target = $region17
    $region16: #{tpu_custom_call.1} parent=1 // pred_region
      %38 = dma.done [#allocation6], 128
    $region17: #{tpu_custom_call.1} parent=1 // pred_fallthru
      _
    %v39 = vld [vmem:[#allocation2] sm:$0xff]
    %v40 = vld [vmem:[#allocation5] sm:$0xff]
    %vm41 = vcmask 261120
    %v43 = vsel %vm41, %v40, 0
    %v46 = vsel %vm41, %v39, 0
    %48 = vmatprep.subr.mxu0 0.0
    %49 = vmatpush1.xpose.msra.mxu0 0.0
    %50 = vmatprep.subr.mxu0 0.0
    %51 = vmatpush1.xpose.msra.mxu0 0.0
    %52 = vmatprep.subr.mxu0 0.0
    %53 = vmatpush1.xpose.msra.mxu0 0.0
    %54 = vmatprep.subr.mxu0 0.0
    %55 = vmatpush1.xpose.msra.mxu0 0.0
    %56 = vmatprep.subr.mxu0 0.0
    %57 = vmatpush1.xpose.msra.mxu0 0.0
    %58 = vmatprep.subr.mxu0 0.0
    %59 = vmatpush1.xpose.msra.mxu0 0.0
    %60 = vmatprep.subr.mxu0 0.0
    %61 = vmatpush1.xpose.msra.mxu0 0.0
    %62 = vmatprep.subr.mxu0 0.0
    %63 = vmatpush1.xpose.msra.mxu0 0.0
    %64 = vmatprep.subr.mxu0 0.0
    %65 = vmatpush1.xpose.msra.mxu0 0.0
    %66 = vmatprep.subr.mxu0 0.0
    %67 = vmatpush1.xpose.msra.mxu0 0.0
    %68 = vmatprep.subr.mxu0 0.0
    %69 = vmatpush1.xpose.msra.mxu0 0.0
    %70 = vmatprep.subr.mxu0 0.0
    %71 = vmatpush1.xpose.msra.mxu0 0.0
    %72 = vmatprep.subr.mxu0 0.0
    %73 = vmatpush1.xpose.msra.mxu0 0.0
    %74 = vmatprep.subr.mxu0 0.0
    %75 = vmatpush1.xpose.msra.mxu0 0.0
    %76 = vmatprep.subr.mxu0 0.0
    %77 = vmatpush1.xpose.msra.mxu0 0.0
    %78 = vmatprep.subr.mxu0 0.0
    %79 = vmatpush1.xpose.msra.mxu0 %v46
    %80 = vmatprep.subr.mxu0 0.0
    %81 = vmatpush2.xpose.msra.mxu0 0.0
    %82 = vmatprep.subr.mxu0 0.0
    %83 = vmatpush2.xpose.msra.mxu0 0.0
    %84 = vmatprep.subr.mxu0 0.0
    %85 = vmatpush2.xpose.msra.mxu0 0.0
    %86 = vmatprep.subr.mxu0 0.0
    %87 = vmatpush2.xpose.msra.mxu0 0.0
    %88 = vmatprep.subr.mxu0 0.0
    %89 = vmatpush2.xpose.msra.mxu0 0.0
    %90 = vmatprep.subr.mxu0 0.0
    %91 = vmatpush2.xpose.msra.mxu0 0.0
    %92 = vmatprep.subr.mxu0 0.0
    %93 = vmatpush2.xpose.msra.mxu0 0.0
    %94 = vmatprep.subr.mxu0 0.0
    %95 = vmatpush2.xpose.msra.mxu0 0.0
    %96 = vmatprep.subr.mxu0 0.0
    %97 = vmatpush2.xpose.msra.mxu0 0.0
    %98 = vmatprep.subr.mxu0 0.0
    %99 = vmatpush2.xpose.msra.mxu0 0.0
    %100 = vmatprep.subr.mxu0 0.0
    %101 = vmatpush2.xpose.msra.mxu0 0.0
    %102 = vmatprep.subr.mxu0 0.0
    %103 = vmatpush2.xpose.msra.mxu0 0.0
    %104 = vmatprep.subr.mxu0 0.0
    %105 = vmatpush2.xpose.msra.mxu0 0.0
    %106 = vmatprep.subr.mxu0 0.0
    %107 = vmatpush2.xpose.msra.mxu0 0.0
    %108 = vmatprep.subr.mxu0 0.0
    %109 = vmatpush2.xpose.msra.mxu0 0.0
    %110 = vmatprep.subr.mxu0 0.0
    %111 = vmatpush2.xpose.msra.mxu0 0.0
    %112 = vmatprep.mubr.f32.mxu0 0.0
    %113 = vmatmul.mubr.f32.gmra.mxu0 %v43
    %v114 = vpop.f32.mrf.mxu0
    %v115 = vadd.f32 0.0, %v114
    %v116 = vpop.f32.mrf.mxu0
    %117 = vdwg.mxu0
    %v118 = vlaneseq
    %v119 = vshrl.u32 %v118, 7
    %vm120 = vcmask 64512
    %v121 = vsel %vm120, %v115, -inf
    %v122 = vrot.slane %v121, 4
    %v123 = vmax.f32 %v121, %v122
    %v124 = vrot.slane %v123, 2
    %v125 = vmax.f32 %v123, %v124
    %v126 = vrot.slane %v125, 1
    %v127 = vmax.f32 %v125, %v126
    %vm128 = vcmp.eq.f32.partialorder %v115, %v127
    %v129 = vsel %vm128, %v119, 8
    %v130 = vsel %vm120, %v129, 2147483647
    %v131 = vrot.slane %v130, 4
    %vm132 = vcmp.lt.s32.totalorder %v130, %v131
    %v133 = vsel %vm132, %v130, %v131
    %v134 = vrot.slane %v133, 2
    %vm135 = vcmp.lt.s32.totalorder %v133, %v134
    %v136 = vsel %vm135, %v133, %v134
    %v137 = vrot.slane %v136, 1
    %vm138 = vcmp.lt.s32.totalorder %v136, %v137
    %v139 = vsel %vm138, %v136, %v137
    %vm140 = vcmp.eq.s32.totalorder %v119, %v139
    %v141 = vsel %vm140, -inf, %v115
    %v142 = vsel %vm120, %v141, -inf
    %v143 = vrot.slane %v142, 4
    %v144 = vmax.f32 %v142, %v143
    %v145 = vrot.slane %v144, 2
    %v146 = vmax.f32 %v144, %v145
    %v147 = vrot.slane %v146, 1
    %v148 = vmax.f32 %v146, %v147
    %vm149 = vcmp.eq.f32.partialorder %v141, %v148
    %v150 = vsel %vm149, %v119, 8
    %v151 = vsel %vm120, %v150, 2147483647
    %v152 = vrot.slane %v151, 4
    %vm153 = vcmp.lt.s32.totalorder %v151, %v152
    %v154 = vsel %vm153, %v151, %v152
    %v155 = vrot.slane %v154, 2
    %vm156 = vcmp.lt.s32.totalorder %v154, %v155
    %v157 = vsel %vm156, %v154, %v155
    %v158 = vrot.slane %v157, 1
    %vm159 = vcmp.lt.s32.totalorder %v157, %v158
    %v160 = vsel %vm159, %v157, %v158
    %v161 = vsub.f32 %v148, %v127
    %v162 = vmul.f32 %v161, 1.442695
    %v163 = vpow.pop %v162
    %v164 = vadd.f32 %v163, 1.0
    %v165 = vrcp.pop %v164
    %vm166 = vcmask 57344
    %167 = vst.msk [vmem:[#allocation7] sm:$0x1] %vm166, %v139
    %168 = vst.msk [vmem:[#allocation8] sm:$0x1] %vm166, %v165
    %169 = vst.msk [vmem:[#allocation7 + $0x1] sm:$0x1] %vm166, %v160
    %v170 = vmul.f32 %v163, %v165
    %171 = vst.msk [vmem:[#allocation8 + $0x1] sm:$0x1] %vm166, %v170
    // Predicated region
    $region18: #{tpu_custom_call.1} parent=1 // pred_check
      _
    $region19: #{tpu_custom_call.1} parent=1 // pred_check_branch
      %173 = sbr.rel (0) target = $region21
    $region20: #{tpu_custom_call.1} parent=1 // pred_region
      %s175 = ssub.s32 32, 32
      %176 = vsyncadd [#allocation4], %s175
      %s178 = sshll.u32 [#allocation7], 4
      %s179 = int_to_ptr.vmem [resolvable:$true] %s178
      %181 = dma.vmem_to_hbm [thread:$0]  %s179, 32, %s2, [#allocation4]
    $region21: #{tpu_custom_call.1} parent=1 // pred_fallthru
      _
    // Predicated region
    $region22: #{tpu_custom_call.1} parent=1 // pred_check
      _
    $region23: #{tpu_custom_call.1} parent=1 // pred_check_branch
      %183 = sbr.rel (0) target = $region25
    $region24: #{tpu_custom_call.1} parent=1 // pred_region
      %s185 = ssub.s32 32, 32
      %186 = vsyncadd [#allocation9], %s185
      %s188 = sshll.u32 [#allocation8], 4
      %s189 = int_to_ptr.vmem [resolvable:$true] %s188
      %191 = dma.vmem_to_hbm [thread:$0]  %s189, 32, %s3, [#allocation9]
    $region25: #{tpu_custom_call.1} parent=1 // pred_fallthru
      _
    // Predicated region
    $region26: #{tpu_custom_call.1} parent=1 // pred_check
      _
    $region27: #{tpu_custom_call.1} parent=1 // pred_check_branch
      %193 = sbr.rel (0) target = $region29
    $region28: #{tpu_custom_call.1} parent=1 // pred_region
      %194 = dma.done [#allocation4], 32
    $region29: #{tpu_custom_call.1} parent=1 // pred_fallthru
      _
    // Predicated region
    $region30: #{tpu_custom_call.1} parent=1 // pred_check
      _
    $region31: #{tpu_custom_call.1} parent=1 // pred_check_branch
      %196 = sbr.rel (0) target = $region33
    $region32: #{tpu_custom_call.1} parent=1 // pred_region
      %197 = dma.done [#allocation9], 32
    $region33: #{tpu_custom_call.1} parent=1 // pred_fallthru
      _
    %198 = vsyncpa [#allocation3], 1
    %199 = vsyncpa [#allocation6], 1
    %200 = vsyncpa [#allocation4], 1
    %201 = vsyncpa [#allocation9], 1

</llo_original>
